<compile_context>
chip_gen: v7x
topology: tpu7x:2x2x1
jax: 0.10.0
libtpu: 0.0.40
codegen_flags: <defaults>
</compile_context>

<pallas_src>
import functools

import numpy as np
import jax
import jax.numpy as jnp
from jax.experimental import pallas as pl
from jax.experimental.pallas import tpu as pltpu

# ---- small, module-consistent shapes: (batch_size, num_classes) ----
B = 8     # batch_size
C = 128   # num_classes (lane-aligned)
EPS = 1e-15


# ----------------------------------------------------------------------------
# Kernel: fused clamp + JS-divergence pointwise term + per-row (class-axis) sum
# ----------------------------------------------------------------------------
def _js_div_kernel(pred_ref, targ_ref, out_ref, *, eps):
    p = jnp.clip(pred_ref[...].astype(jnp.float32), eps, 1.0 - eps)   # (B, C)
    q = jnp.clip(targ_ref[...].astype(jnp.float32), eps, 1.0 - eps)   # (B, C)
    m = 0.5 * (p + q)
    # 0.5 * ( m*(log m - log p) + m*(log m - log q) )
    #   == m * (log m - 0.5*(log p + log q))
    js = m * (jnp.log(m) - 0.5 * (jnp.log(p) + jnp.log(q)))           # (B, C)
    # per-row sum over the class (lane) axis; write one (1, B) slab in one store
    out_ref[...] = jnp.sum(js, axis=1)[None, :]                       # (1, B)


def js_div_rowsum_pallas(pred, target, eps=EPS):
    """pred, target: (B, C) probability vectors -> per-row JS divergence (B,)."""
    Bb, Cc = pred.shape
    assert target.shape == (Bb, Cc)

    kernel = functools.partial(_js_div_kernel, eps=float(eps))
    out = pl.pallas_call(
        kernel,
        out_shape=jax.ShapeDtypeStruct((1, Bb), jnp.float32),
        grid=(1,),  # whole problem in one grid step (fits VMEM easily)
        in_specs=[
            pl.BlockSpec((Bb, Cc), lambda i: (0, 0)),
            pl.BlockSpec((Bb, Cc), lambda i: (0, 0)),
        ],
        out_specs=pl.BlockSpec((1, Bb), lambda i: (0, 0)),
        compiler_params=pltpu.CompilerParams(
            dimension_semantics=("arbitrary",)),
    )(pred.astype(jnp.float32), target.astype(jnp.float32))
    return out.reshape(Bb)


def js_div_loss(pred, target, eps=EPS, keep_batch_dim=False):
    """Full JSDivLoss.forward: Pallas kernel for the heavy pointwise+reduce work,
    trivial final reduction (batchmean) done in the wrapper."""
    row = js_div_rowsum_pallas(pred, target, eps)        # (B,)
    if keep_batch_dim:
        return row                                       # reduction='none' + sum over dim=-1
    return jnp.sum(row) / pred.shape[0]                  # reduction='batchmean'


# ----------------------------------------------------------------------------
# Pure-JAX reference (same math, no Pallas) for a correctness check
# ----------------------------------------------------------------------------
def js_div_reference(pred, target, eps=EPS, keep_batch_dim=False):
    p = jnp.clip(pred.astype(jnp.float32), eps, 1.0 - eps)
    q = jnp.clip(target.astype(jnp.float32), eps, 1.0 - eps)
    m = 0.5 * (p + q)
    kl_pm = m * (jnp.log(m) - jnp.log(p))   # kl_div(p.log(), m.log(), log_target=True)
    kl_qm = m * (jnp.log(m) - jnp.log(q))   # kl_div(q.log(), m.log(), log_target=True)
    js = 0.5 * (kl_pm + kl_qm)
    if keep_batch_dim:
        return jnp.sum(js, axis=-1)
    return jnp.sum(js) / pred.shape[0]


if __name__ == "__main__":
    key = jax.random.PRNGKey(0)
    kp, kt = jax.random.split(key)

    # normalized (non-log) probability vectors of shape (batch_size, num_classes)
    pred = jax.nn.softmax(jax.random.normal(kp, (B, C), dtype=jnp.float32), axis=-1)
    target = jax.nn.softmax(jax.random.normal(kt, (B, C), dtype=jnp.float32), axis=-1)

    out_batchmean = jax.block_until_ready(js_div_loss(pred, target, keep_batch_dim=False))
    out_perbatch = jax.block_until_ready(js_div_loss(pred, target, keep_batch_dim=True))

    ref_batchmean = jax.block_until_ready(js_div_reference(pred, target, keep_batch_dim=False))
    ref_perbatch = jax.block_until_ready(js_div_reference(pred, target, keep_batch_dim=True))

    assert out_perbatch.shape == (B,), out_perbatch.shape
    assert out_batchmean.shape == (), out_batchmean.shape
    np.testing.assert_allclose(np.asarray(out_perbatch), np.asarray(ref_perbatch),
                               rtol=1e-5, atol=1e-6)
    np.testing.assert_allclose(np.asarray(out_batchmean), np.asarray(ref_batchmean),
                               rtol=1e-5, atol=1e-6)
    print("KERNEL_OK")
</pallas_src>

<mosaic_0001>
module attributes {stable_mosaic.version = 11 : i64} {
  func.func @_js_div_kernel(%arg0: i32, %arg1: memref<8x128xf32, #tpu.memory_space<vmem>>, %arg2: memref<8x128xf32, #tpu.memory_space<vmem>>, %arg3: memref<1x8xf32, #tpu.memory_space<vmem>>) attributes {dimension_semantics = [#tpu.dimension_semantics<arbitrary>], iteration_bounds = array<i64: 1>, scalar_prefetch = 0 : i64, scratch_operands = 0 : i64, tpu.core_type = #tpu.core_type<tc>, window_params = [{pipeline_mode = #tpu.pipeline_mode<synchronous>, transform_indices = @transform_0, window_bounds = array<i64: 8, 128>}, {pipeline_mode = #tpu.pipeline_mode<synchronous>, transform_indices = @transform_1, window_bounds = array<i64: 8, 128>}, {pipeline_mode = #tpu.pipeline_mode<synchronous>, transform_indices = @transform_2, window_bounds = array<i64: 1, 8>}]} {
    %c0 = arith.constant 0 : index
    %c0_0 = arith.constant 0 : index
    %0 = vector.load %arg1[%c0, %c0_0] : memref<8x128xf32, #tpu.memory_space<vmem>>, vector<8x128xf32>
    %cst = arith.constant 1.000000e-15 : f32
    %cst_1 = arith.constant 1.000000e+00 : f32
    %1 = vector.broadcast %cst : f32 to vector<8x128xf32>
    %2 = arith.maximumf %1, %0 : vector<8x128xf32>
    %3 = vector.broadcast %cst_1 : f32 to vector<8x128xf32>
    %4 = arith.minimumf %3, %2 : vector<8x128xf32>
    %c0_2 = arith.constant 0 : index
    %c0_3 = arith.constant 0 : index
    %5 = vector.load %arg2[%c0_2, %c0_3] : memref<8x128xf32, #tpu.memory_space<vmem>>, vector<8x128xf32>
    %cst_4 = arith.constant 1.000000e-15 : f32
    %cst_5 = arith.constant 1.000000e+00 : f32
    %6 = vector.broadcast %cst_4 : f32 to vector<8x128xf32>
    %7 = arith.maximumf %6, %5 : vector<8x128xf32>
    %8 = vector.broadcast %cst_5 : f32 to vector<8x128xf32>
    %9 = arith.minimumf %8, %7 : vector<8x128xf32>
    %10 = arith.addf %4, %9 : vector<8x128xf32>
    %cst_6 = arith.constant 5.000000e-01 : f32
    %11 = vector.broadcast %cst_6 : f32 to vector<8x128xf32>
    %12 = arith.mulf %11, %10 : vector<8x128xf32>
    %13 = math.log %12 : vector<8x128xf32>
    %14 = math.log %4 : vector<8x128xf32>
    %15 = math.log %9 : vector<8x128xf32>
    %16 = arith.addf %14, %15 : vector<8x128xf32>
    %cst_7 = arith.constant 5.000000e-01 : f32
    %17 = vector.broadcast %cst_7 : f32 to vector<8x128xf32>
    %18 = arith.mulf %17, %16 : vector<8x128xf32>
    %19 = arith.subf %13, %18 : vector<8x128xf32>
    %20 = arith.mulf %12, %19 : vector<8x128xf32>
    %cst_8 = arith.constant dense<0.000000e+00> : vector<8xf32>
    %21 = vector.multi_reduction <add>, %20, %cst_8 [1] : vector<8x128xf32> to vector<8xf32>
    %22 = vector.shape_cast %21 : vector<8xf32> to vector<1x8xf32>
    %c0_9 = arith.constant 0 : index
    %c0_10 = arith.constant 0 : index
    %23 = vector.load %arg3[%c0_9, %c0_10] : memref<1x8xf32, #tpu.memory_space<vmem>>, vector<1x8xf32>
    tpu.vector_store %arg3[%c0_9, %c0_10], %22 {strides = array<i32>} : memref<1x8xf32, #tpu.memory_space<vmem>>, vector<1x8xf32>,
    return
  }
  func.func @transform_0(%arg0: i32) -> (i32, i32) {
    %c0_i32 = arith.constant 0 : i32
    %c0_i32_0 = arith.constant 0 : i32
    %c0_i32_1 = arith.constant 0 : i32
    return %c0_i32, %c0_i32_0 : i32, i32
  }
  func.func @transform_1(%arg0: i32) -> (i32, i32) {
    %c0_i32 = arith.constant 0 : i32
    %c0_i32_0 = arith.constant 0 : i32
    %c0_i32_1 = arith.constant 0 : i32
    return %c0_i32, %c0_i32_0 : i32, i32
  }
  func.func @transform_2(%arg0: i32) -> (i32, i32) {
    %c0_i32 = arith.constant 0 : i32
    %c0_i32_0 = arith.constant 0 : i32
    %c0_i32_1 = arith.constant 0 : i32
    return %c0_i32, %c0_i32_0 : i32, i32
  }
}

</mosaic_0001>

<llo_original>
// kernel: tpu_custom_call.1
$region0: #{tpu_custom_call.1}
  #allocation0 [shape = 'u32[]', space=smem, size = 0x4, offset = 0x4, fixed_abs, tag = 'smem constant byte address 0x4 - core index']
  #allocation1 [shape = 'u32[144,128]{1,0:T(1,128)}', space=vmem, size = 0x12000, scoped, tag = 'internal scratch']
  %s0 = inlined_call_operand.hbm [shape: f32[8,128], index: 0, kind: input, shape index: {}]
  %s1 = inlined_call_operand.hbm [shape: f32[8,128], index: 1, kind: input, shape index: {}]
  %s2 = inlined_call_operand.hbm [shape: f32[1,8], index: 2, kind: output, shape index: {}]
  %s3 = sld [smem:[#allocation0]]
  $region26: #{tpu_custom_call.1} parent=0
    _
  %s5 = ssub.s32 1, %s3
  %s6 = scalar_select 0, %s5, %s3
  $region1: #{tpu_custom_call.1} parent=0
    #allocation2 [shape = 'u8[4096]{0}', space=vmem, size = 0x1000, scoped, tag = 'input window, operand 0, single buffered']
    #allocation3 [shape = 's32[1]{0}', space=sflag, size = 0x4, scoped, tag = 'scoped memory for tpu_custom_call.1']
    #allocation4 [shape = 's32[1]{0}', space=sflag, size = 0x4, scoped, tag = 'scoped memory for tpu_custom_call.1']
    #allocation5 [shape = 'u8[4096]{0}', space=vmem, size = 0x1000, scoped, tag = 'input window, operand 1, single buffered']
    #allocation6 [shape = 's32[1]{0}', space=sflag, size = 0x4, scoped, tag = 'scoped memory for tpu_custom_call.1']
    #allocation7 [shape = 'u8[512]{0}', space=vmem, size = 0x400, scoped, tag = 'output window, operand 0, single buffered']
    %7 = vsyncpa [#allocation3], 0
    %8 = vsyncpa [#allocation6], 0
    %9 = vsyncpa [#allocation4], 0
    // Predicated region
    $region2: #{tpu_custom_call.1} parent=1 // pred_check
      _
    $region3: #{tpu_custom_call.1} parent=1 // pred_check_branch
      %11 = sbr.rel (0) target = $region5
    $region4: #{tpu_custom_call.1} parent=1 // pred_region
      %s13 = ssub.s32 128, 128
      %14 = vsyncadd [#allocation3], %s13
      %s16 = sshll.u32 [#allocation2], 4
      %s17 = int_to_ptr.vmem [resolvable:$true] %s16
      %19 = dma.hbm_to_vmem [thread:$0]  %s0, 128, %s17, [#allocation3]
    $region5: #{tpu_custom_call.1} parent=1 // pred_fallthru
      _
    // Predicated region
    $region6: #{tpu_custom_call.1} parent=1 // pred_check
      _
    $region7: #{tpu_custom_call.1} parent=1 // pred_check_branch
      %21 = sbr.rel (0) target = $region9
    $region8: #{tpu_custom_call.1} parent=1 // pred_region
      %s23 = ssub.s32 128, 128
      %24 = vsyncadd [#allocation6], %s23
      %s26 = sshll.u32 [#allocation5], 4
      %s27 = int_to_ptr.vmem [resolvable:$true] %s26
      %29 = dma.hbm_to_vmem [thread:$0]  %s1, 128, %s27, [#allocation6]
    $region9: #{tpu_custom_call.1} parent=1 // pred_fallthru
      _
    // Predicated region
    $region10: #{tpu_custom_call.1} parent=1 // pred_check
      _
    $region11: #{tpu_custom_call.1} parent=1 // pred_check_branch
      %31 = sbr.rel (0) target = $region13
    $region12: #{tpu_custom_call.1} parent=1 // pred_region
      %32 = dma.done [#allocation3], 128
    $region13: #{tpu_custom_call.1} parent=1 // pred_fallthru
      _
    // Predicated region
    $region14: #{tpu_custom_call.1} parent=1 // pred_check
      _
    $region15: #{tpu_custom_call.1} parent=1 // pred_check_branch
      %34 = sbr.rel (0) target = $region17
    $region16: #{tpu_custom_call.1} parent=1 // pred_region
      %35 = dma.done [#allocation6], 128
    $region17: #{tpu_custom_call.1} parent=1 // pred_fallthru
      _
    %v36 = vld [vmem:[#allocation2] sm:$0xff]
    %v37 = vmax.f32 %v36, 1e-15
    %v38 = vmin.f32 %v37, 1.0
    %v39 = vld [vmem:[#allocation5] sm:$0xff]
    %v40 = vmax.f32 %v39, 1e-15
    %v41 = vmin.f32 %v40, 1.0
    %v42 = vadd.f32 %v38, %v41
    %v43 = vmul.f32 %v42, 0.5
    %v44 = vlog2.pop %v43
    %v45 = vmul.f32 %v44, 0.6931472
    %v46 = vlog2.pop %v38
    %v47 = vmul.f32 %v46, 0.6931472
    %v48 = vlog2.pop %v41
    %v49 = vmul.f32 %v48, 0.6931472
    %v50 = vadd.f32 %v47, %v49
    %v51 = vmul.f32 %v50, 0.5
    %v52 = vsub.f32 %v45, %v51
    %v53 = vmul.f32 %v43, %v52
    %54 = vadd.xlane.f32.xlu0 %v53
    %v55 = vpop.xlane.xlu0 %54
    %v57 = vlaneseq
    %v58 = vand.u32 %v57, 127
    %v59 = vlaneseq
    %v60 = vshrl.u32 %v59, 7
    %v61 = vsub.s32 %v58, %v60
    %v62 = vrot.slane %v55, %v61
    %vm64 = vcmask 57344
    %65 = vst.msk [vmem:[#allocation7] sm:$0x1] %vm64, %v62
    // Predicated region
    $region18: #{tpu_custom_call.1} parent=1 // pred_check
      _
    $region19: #{tpu_custom_call.1} parent=1 // pred_check_branch
      %67 = sbr.rel (0) target = $region21
    $region20: #{tpu_custom_call.1} parent=1 // pred_region
      %s69 = ssub.s32 16, 16
      %70 = vsyncadd [#allocation4], %s69
      %s72 = sshll.u32 [#allocation7], 4
      %s73 = int_to_ptr.vmem [resolvable:$true] %s72
      %75 = dma.vmem_to_hbm [thread:$0]  %s73, 16, %s2, [#allocation4]
    $region21: #{tpu_custom_call.1} parent=1 // pred_fallthru
      _
    // Predicated region
    $region22: #{tpu_custom_call.1} parent=1 // pred_check
      _
    $region23: #{tpu_custom_call.1} parent=1 // pred_check_branch
      %77 = sbr.rel (0) target = $region25
    $region24: #{tpu_custom_call.1} parent=1 // pred_region
      %78 = dma.done [#allocation4], 16
    $region25: #{tpu_custom_call.1} parent=1 // pred_fallthru
      _
    %79 = vsyncpa [#allocation3], 1
    %80 = vsyncpa [#allocation6], 1
    %81 = vsyncpa [#allocation4], 1

</llo_original>
